<compile_context>
chip_gen: v6e
topology: v6e:2x2x1
jax: 0.10.0
libtpu: 0.0.40
codegen_flags: <defaults>
</compile_context>

<pallas_src>
import functools
import math

import jax
import jax.numpy as jnp
from jax import lax
from jax.experimental import pallas as pl
from jax.experimental.pallas import tpu as pltpu


# ------------------------------ fused kernel ---------------------------------


def _fused_kernel(x_ref, w1t_ref, b1_ref, w2t_ref, b2_ref, o_ref, *, inv_hw):
    """Per-batch slab: mean -> MLP -> sigmoid -> scale; x is read from HBM once."""
    x = x_ref[...]                                              # (1, C, HW), native dtype
    pooled = jnp.sum(x.astype(jnp.float32), axis=2) * inv_hw    # (1, C) f32 (true mean)

    # Tiny MLP on the VPU (broadcast-multiply + reduce): the hidden dim is a few
    # elements, so keep it off the MXU / avoid degenerate matmul lowering.
    h = jnp.sum(pooled[:, :, None] * w1t_ref[...][None, :, :], axis=1)   # (1, Hid)
    h = jnp.maximum(h + b1_ref[...], 0.0)
    att = jnp.sum(h[:, :, None] * w2t_ref[...][None, :, :], axis=1)      # (1, C)
    att = att + b2_ref[...]
    gate = 1.0 / (1.0 + jnp.exp(-att))                                   # (1, C) f32

    # Single cast of the gate per batch; multiply in the input's native dtype.
    o_ref[...] = x * gate[:, :, None].astype(x.dtype)


# ------------------------------ tiled kernels --------------------------------


def _pool_sum_kernel(x_ref, psum_ref, *, tile, hw, tiles_per_split):
    """Masked spatial sum of one (1, C, tile) block into a (1, 1, C, 1) accumulator."""
    s = pl.program_id(2)

    @pl.when(s == 0)
    def _():
        psum_ref[...] = jnp.zeros_like(psum_ref)

    # Global spatial tile index (may point at a padded / partial tile).
    t = pl.program_id(1) * tiles_per_split + s
    lane = lax.broadcasted_iota(jnp.int32, x_ref.shape, 2)
    valid = (t * tile + lane) < hw                 # masks partial + padded grid slots
    xv = jnp.where(valid, x_ref[...].astype(jnp.float32), 0.0)
    psum_ref[...] += jnp.sum(xv, axis=2, keepdims=True).reshape(psum_ref.shape)


def _scale_kernel(x_ref, gate_ref, o_ref):
    """out = x * gate; gate (already in x.dtype) broadcasts over the lane axis."""
    o_ref[...] = x_ref[...] * gate_ref[...]


# ------------------------------ sizing helpers --------------------------------

_DEFAULT_BLOCK_BYTES = 4 * 1024 * 1024     # ~4 MiB lane tiles (v6e/v7x sweet spot)


def _vmem_physical_bytes():
    try:
        cap = getattr(pltpu.get_tpu_info(), "vmem_capacity_bytes", None)
        if cap:
            return int(cap)
    except Exception:
        pass
    return 64 * 1024 * 1024                 # conservative default (v7x per-TensorCore)


def _vmem_limit_bytes():
    phys = _vmem_physical_bytes()
    # Leave headroom below physical VMEM; 48 MiB on v7x, 96 MiB on v5e/v6e.
    return int(min(max(phys - 16 * 1024 * 1024, 32 * 1024 * 1024), 96 * 1024 * 1024))


def _sizing_itemsize(dtype):
    # Fold in the f32 temp created by .astype(jnp.float32) for sub-32-bit inputs.
    it = jnp.dtype(dtype).itemsize
    return it + (4 if it < 4 else 0)


def _choose_tile(hw, c, sizing_itemsize, target_block_bytes):
    lanes = (target_block_bytes // max(1, c * sizing_itemsize)) // 128 * 128
    lanes = max(128, int(lanes))
    return hw if lanes >= hw else lanes


# --------------------------------- wrapper ------------------------------------


def channel_gate(x, w1, b1, w2, b2, *, force_tiled=False, tile_override=None,
                 target_block_bytes=_DEFAULT_BLOCK_BYTES):
    """x: (N, C, H, W).  w1: (Hid, C), b1: (Hid,), w2: (C, Hid), b2: (C,)."""
    N, C, H, W = x.shape
    hid = w1.shape[0]
    hw = H * W
    itemsize = jnp.dtype(x.dtype).itemsize
    x_flat = x.reshape(N, C, hw)            # metadata-only reshape, no HBM copy

    vmem_limit = _vmem_limit_bytes()

    # ---------------- fused single-pass path (x read from HBM once) ----------
    slab_bytes = C * hw * itemsize
    f32_temp = C * hw * 4 if itemsize < 4 else 0          # reduce temp for bf16 inputs
    fused_ws = 4 * slab_bytes + f32_temp + (1 << 20)      # 2x in + 2x out blocks + slack
    if (not force_tiled) and fused_ws <= vmem_limit - (6 << 20):
        out = pl.pallas_call(
            functools.partial(_fused_kernel, inv_hw=1.0 / float(hw)),
            out_shape=jax.ShapeDtypeStruct((N, C, hw), x.dtype),
            grid_spec=pltpu.PrefetchScalarGridSpec(
                num_scalar_prefetch=0,
                grid=(N,),
                in_specs=[
                    pl.BlockSpec((1, C, hw), lambda n: (n, 0, 0)),
                    pl.BlockSpec((C, hid), lambda n: (0, 0)),
                    pl.BlockSpec((1, hid), lambda n: (0, 0)),
                    pl.BlockSpec((hid, C), lambda n: (0, 0)),
                    pl.BlockSpec((1, C), lambda n: (0, 0)),
                ],
                out_specs=pl.BlockSpec((1, C, hw), lambda n: (n, 0, 0)),
            ),
            compiler_params=pltpu.CompilerParams(
                dimension_semantics=("parallel",),
                vmem_limit_bytes=vmem_limit,
            ),
            cost_estimate=pl.CostEstimate(
                flops=2 * N * C * hw + 4 * N * C * hid,
                transcendentals=N * C,
                bytes_accessed=2 * N * C * hw * itemsize,
            ),
        )(
            x_flat,
            w1.T.astype(jnp.float32),
            b1.reshape(1, hid).astype(jnp.float32),
            w2.T.astype(jnp.float32),
            b2.reshape(1, C).astype(jnp.float32),
        )
        return out.reshape(N, C, H, W)

    # ---------------- tiled two-pass fallback (very large per-batch slabs) ----
    sizing_it = _sizing_itemsize(x.dtype)
    tile = int(tile_override) if tile_override is not None else _choose_tile(
        hw, C, sizing_it, target_block_bytes)
    tile = min(tile, hw)
    n_tiles = pl.cdiv(hw, tile)
    split = 2 if n_tiles >= 2 else 1          # give both v7x TensorCores reduction work
    tiles_per_split = pl.cdiv(n_tiles, split)

    def x_pool_map(n, g, s):
        # Clamp padded grid slots (odd n_tiles) to a valid tile; the kernel fully
        # masks their contribution based on the *unclamped* global index.
        return (n, 0, jnp.minimum(g * tiles_per_split + s, n_tiles - 1))

    # --- pass 1: masked spatial-sum partials (f32 accumulator per split) ------
    partials = pl.pallas_call(
        functools.partial(_pool_sum_kernel, tile=tile, hw=hw,
                          tiles_per_split=tiles_per_split),
        out_shape=jax.ShapeDtypeStruct((N, split, C, 1), jnp.float32),
        grid_spec=pltpu.PrefetchScalarGridSpec(
            num_scalar_prefetch=0,
            grid=(N, split, tiles_per_split),
            in_specs=[pl.BlockSpec((1, C, tile), x_pool_map)],
            out_specs=pl.BlockSpec((1, 1, C, 1), lambda n, g, s: (n, g, 0, 0)),
        ),
        compiler_params=pltpu.CompilerParams(
            dimension_semantics=("parallel", "parallel", "arbitrary"),
            vmem_limit_bytes=vmem_limit,
        ),
        cost_estimate=pl.CostEstimate(
            flops=N * C * hw,
            transcendentals=0,
            bytes_accessed=N * C * hw * itemsize + N * split * C * 4,
        ),
    )(x_flat)

    # --- tiny MLP + sigmoid on the (N, C) pooled mean (plain JAX; negligible) --
    pooled = jnp.sum(partials, axis=1)[:, :, 0] * (1.0 / float(hw))     # (N, C)
    h = jnp.maximum(pooled @ w1.T.astype(jnp.float32) + b1, 0.0)
    att = h @ w2.T.astype(jnp.float32) + b2
    gate = jax.nn.sigmoid(att).astype(x.dtype)[:, :, None]              # (N, C, 1)

    # --- pass 2: elementwise scale (lane-dense blocks; boundary writes masked) -
    out = pl.pallas_call(
        _scale_kernel,
        out_shape=jax.ShapeDtypeStruct((N, C, hw), x.dtype),
        grid_spec=pltpu.PrefetchScalarGridSpec(
            num_scalar_prefetch=0,
            grid=(N, n_tiles),
            in_specs=[
                pl.BlockSpec((1, C, tile), lambda n, s: (n, 0, s)),
                pl.BlockSpec((1, C, 1), lambda n, s: (n, 0, 0)),
            ],
            out_specs=pl.BlockSpec((1, C, tile), lambda n, s: (n, 0, s)),
        ),
        compiler_params=pltpu.CompilerParams(
            dimension_semantics=("parallel", "parallel"),
            vmem_limit_bytes=vmem_limit,
        ),
        cost_estimate=pl.CostEstimate(
            flops=N * C * hw,
            transcendentals=0,
            bytes_accessed=2 * N * C * hw * itemsize + N * C * itemsize,
        ),
    )(x_flat, gate)

    return out.reshape(N, C, H, W)


# ------------------------------ reference & test ------------------------------


def reference_channel_gate(x, w1, b1, w2, b2):
    # Pure-JAX reference mirroring the PyTorch module (pool_types=['avg']).
    pooled = jnp.mean(x.astype(jnp.float32), axis=(2, 3))              # (N, C)
    h = jnp.maximum(pooled @ w1.T + b1, 0.0)
    att = h @ w2.T + b2
    scale = jax.nn.sigmoid(att)[:, :, None, None].astype(x.dtype)
    return x * scale


def _make_case(key, N, C, H, W, reduction_ratio):
    hid = C // reduction_ratio if C // reduction_ratio > 0 else C // 4
    kx, k1, k2, k3, k4 = jax.random.split(key, 5)
    x = jax.random.normal(kx, (N, C, H, W), dtype=jnp.float32)
    # Deterministic init mimicking nn.Linear's uniform(-1/sqrt(fan_in), 1/sqrt(fan_in)).
    bound1 = 1.0 / math.sqrt(C)
    w1 = jax.random.uniform(k1, (hid, C), jnp.float32, -bound1, bound1)
    b1 = jax.random.uniform(k2, (hid,), jnp.float32, -bound1, bound1)
    bound2 = 1.0 / math.sqrt(hid)
    w2 = jax.random.uniform(k3, (C, hid), jnp.float32, -bound2, bound2)
    b2 = jax.random.uniform(k4, (C,), jnp.float32, -bound2, bound2)
    return x, w1, b1, w2, b2


if __name__ == "__main__":
    key = jax.random.PRNGKey(0)
    keys = jax.random.split(key, 4)

    cases = [
        # (shape, reduction_ratio, kwargs)
        ((2, 32, 16, 16), 16, {}),                                            # fused, 128-aligned HW
        ((2, 20, 9, 9), 4, {}),                                               # fused, ragged HW, C % 8 != 0
        ((2, 32, 16, 16), 16, dict(force_tiled=True, tile_override=128)),     # tiled, aligned, 2-way split
        ((1, 32, 17, 17), 16, dict(force_tiled=True, tile_override=128)),     # tiled, partial tile + padded slot
    ]

    for k, ((N, C, H, W), rr, kw) in zip(keys, cases):
        x, w1, b1, w2, b2 = _make_case(k, N, C, H, W, rr)
        out = jax.block_until_ready(channel_gate(x, w1, b1, w2, b2, **kw))
        ref = reference_channel_gate(x, w1, b1, w2, b2)
        assert out.shape == x.shape
        assert jnp.allclose(out, ref, atol=1e-4, rtol=1e-4), (
            f"mismatch vs reference for case {(N, C, H, W)} {kw}")

    print("KERNEL_OK")
</pallas_src>

<mosaic_0001>
module attributes {stable_mosaic.version = 11 : i64} {
  func.func @_fused_kernel(%arg0: i32, %arg1: memref<1x32x256xf32, #tpu.memory_space<vmem>>, %arg2: memref<32x2xf32, #tpu.memory_space<vmem>>, %arg3: memref<1x2xf32, #tpu.memory_space<vmem>>, %arg4: memref<2x32xf32, #tpu.memory_space<vmem>>, %arg5: memref<1x32xf32, #tpu.memory_space<vmem>>, %arg6: memref<1x32x256xf32, #tpu.memory_space<vmem>>) attributes {dimension_semantics = [#tpu.dimension_semantics<parallel>], iteration_bounds = array<i64: 2>, scalar_prefetch = 0 : i64, scratch_operands = 0 : i64, tpu.core_type = #tpu.core_type<tc>, window_params = [{transform_indices = @transform_0, window_bounds = array<i64: 1, 32, 256>}, {pipeline_mode = #tpu.pipeline_mode<synchronous>, transform_indices = @transform_1, window_bounds = array<i64: 32, 2>}, {pipeline_mode = #tpu.pipeline_mode<synchronous>, transform_indices = @transform_2, window_bounds = array<i64: 1, 2>}, {pipeline_mode = #tpu.pipeline_mode<synchronous>, transform_indices = @transform_3, window_bounds = array<i64: 2, 32>}, {pipeline_mode = #tpu.pipeline_mode<synchronous>, transform_indices = @transform_4, window_bounds = array<i64: 1, 32>}, {transform_indices = @transform_5, window_bounds = array<i64: 1, 32, 256>}]} {
    %c0 = arith.constant 0 : index
    %c0_0 = arith.constant 0 : index
    %c0_1 = arith.constant 0 : index
    %0 = vector.load %arg1[%c0, %c0_0, %c0_1] : memref<1x32x256xf32, #tpu.memory_space<vmem>>, vector<1x32x256xf32>
    %cst = arith.constant dense<0.000000e+00> : vector<1x32xf32>
    %1 = vector.multi_reduction <add>, %0, %cst [2] : vector<1x32x256xf32> to vector<1x32xf32>
    %cst_2 = arith.constant 3.906250e-03 : f32
    %2 = vector.broadcast %cst_2 : f32 to vector<1x32xf32>
    %3 = arith.mulf %1, %2 : vector<1x32xf32>
    %4 = vector.shape_cast %3 : vector<1x32xf32> to vector<1x32x1xf32>
    %c0_3 = arith.constant 0 : index
    %c0_4 = arith.constant 0 : index
    %5 = vector.load %arg2[%c0_3, %c0_4] : memref<32x2xf32, #tpu.memory_space<vmem>>, vector<32x2xf32>
    %6 = vector.shape_cast %5 : vector<32x2xf32> to vector<1x32x2xf32>
    %7 = vector.broadcast %4 : vector<1x32x1xf32> to vector<1x32x2xf32>
    %8 = arith.mulf %7, %6 : vector<1x32x2xf32>
    %cst_5 = arith.constant dense<0.000000e+00> : vector<1x2xf32>
    %9 = vector.multi_reduction <add>, %8, %cst_5 [1] : vector<1x32x2xf32> to vector<1x2xf32>
    %c0_6 = arith.constant 0 : index
    %c0_7 = arith.constant 0 : index
    %10 = vector.load %arg3[%c0_6, %c0_7] : memref<1x2xf32, #tpu.memory_space<vmem>>, vector<1x2xf32>
    %11 = arith.addf %9, %10 : vector<1x2xf32>
    %cst_8 = arith.constant 0.000000e+00 : f32
    %12 = vector.broadcast %cst_8 : f32 to vector<1x2xf32>
    %13 = arith.maximumf %11, %12 : vector<1x2xf32>
    %14 = vector.shape_cast %13 : vector<1x2xf32> to vector<1x2x1xf32>
    %c0_9 = arith.constant 0 : index
    %c0_10 = arith.constant 0 : index
    %15 = vector.load %arg4[%c0_9, %c0_10] : memref<2x32xf32, #tpu.memory_space<vmem>>, vector<2x32xf32>
    %16 = vector.shape_cast %15 : vector<2x32xf32> to vector<1x2x32xf32>
    %17 = vector.broadcast %14 : vector<1x2x1xf32> to vector<1x2x32xf32>
    %18 = arith.mulf %17, %16 : vector<1x2x32xf32>
    %cst_11 = arith.constant dense<0.000000e+00> : vector<1x32xf32>
    %19 = vector.multi_reduction <add>, %18, %cst_11 [1] : vector<1x2x32xf32> to vector<1x32xf32>
    %c0_12 = arith.constant 0 : index
    %c0_13 = arith.constant 0 : index
    %20 = vector.load %arg5[%c0_12, %c0_13] : memref<1x32xf32, #tpu.memory_space<vmem>>, vector<1x32xf32>
    %21 = arith.addf %19, %20 : vector<1x32xf32>
    %cst_14 = arith.constant 0.000000e+00 : f32
    %22 = vector.broadcast %cst_14 : f32 to vector<1x32xf32>
    %23 = arith.subf %22, %21 : vector<1x32xf32>
    %24 = math.exp %23 : vector<1x32xf32>
    %cst_15 = arith.constant 1.000000e+00 : f32
    %25 = vector.broadcast %cst_15 : f32 to vector<1x32xf32>
    %26 = arith.addf %25, %24 : vector<1x32xf32>
    %cst_16 = arith.constant 1.000000e+00 : f32
    %27 = vector.broadcast %cst_16 : f32 to vector<1x32xf32>
    %28 = arith.divf %27, %26 : vector<1x32xf32>
    %29 = vector.shape_cast %28 : vector<1x32xf32> to vector<1x32x1xf32>
    %30 = vector.broadcast %29 : vector<1x32x1xf32> to vector<1x32x256xf32>
    %31 = arith.mulf %0, %30 : vector<1x32x256xf32>
    %c0_17 = arith.constant 0 : index
    %c0_18 = arith.constant 0 : index
    %c0_19 = arith.constant 0 : index
    %32 = vector.load %arg6[%c0_17, %c0_18, %c0_19] : memref<1x32x256xf32, #tpu.memory_space<vmem>>, vector<1x32x256xf32>
    tpu.vector_store %arg6[%c0_17, %c0_18, %c0_19], %31 {strides = array<i32>} : memref<1x32x256xf32, #tpu.memory_space<vmem>>, vector<1x32x256xf32>,
    return
  }
  func.func @transform_0(%arg0: i32) -> (i32, i32, i32) {
    %c0_i32 = arith.constant 0 : i32
    %c0_i32_0 = arith.constant 0 : i32
    %c0_i32_1 = arith.constant 0 : i32
    return %arg0, %c0_i32, %c0_i32_0 : i32, i32, i32
  }
  func.func @transform_1(%arg0: i32) -> (i32, i32) {
    %c0_i32 = arith.constant 0 : i32
    %c0_i32_0 = arith.constant 0 : i32
    %c0_i32_1 = arith.constant 0 : i32
    return %c0_i32, %c0_i32_0 : i32, i32
  }
  func.func @transform_2(%arg0: i32) -> (i32, i32) {
    %c0_i32 = arith.constant 0 : i32
    %c0_i32_0 = arith.constant 0 : i32
    %c0_i32_1 = arith.constant 0 : i32
    return %c0_i32, %c0_i32_0 : i32, i32
  }
  func.func @transform_3(%arg0: i32) -> (i32, i32) {
    %c0_i32 = arith.constant 0 : i32
    %c0_i32_0 = arith.constant 0 : i32
    %c0_i32_1 = arith.constant 0 : i32
    return %c0_i32, %c0_i32_0 : i32, i32
  }
  func.func @transform_4(%arg0: i32) -> (i32, i32) {
    %c0_i32 = arith.constant 0 : i32
    %c0_i32_0 = arith.constant 0 : i32
    %c0_i32_1 = arith.constant 0 : i32
    return %c0_i32, %c0_i32_0 : i32, i32
  }
  func.func @transform_5(%arg0: i32) -> (i32, i32, i32) {
    %c0_i32 = arith.constant 0 : i32
    %c0_i32_0 = arith.constant 0 : i32
    %c0_i32_1 = arith.constant 0 : i32
    return %arg0, %c0_i32, %c0_i32_0 : i32, i32, i32
  }
}

</mosaic_0001>

<llo_original>
// kernel: tpu_custom_call.1
$region0: #{tpu_custom_call.1}
  #allocation0 [shape = 'u32[]', space=smem, size = 0x4, offset = 0x4, fixed_abs, tag = 'smem constant byte address 0x4 - core index']
  #allocation1 [shape = 'u32[144,128]{1,0:T(1,128)}', space=vmem, size = 0x12000, scoped, tag = 'internal scratch']
  %s0 = inlined_call_operand.hbm [shape: f32[2,32,256], index: 0, kind: input, shape index: {}]
  %s1 = inlined_call_operand.vmem [shape: f32[32,2], index: 1, kind: input, shape index: {}]
  %s2 = inlined_call_operand.vmem [shape: f32[1,2], index: 2, kind: input, shape index: {}]
  %s3 = inlined_call_operand.vmem [shape: f32[2,32], index: 3, kind: input, shape index: {}]
  %s4 = inlined_call_operand.vmem [shape: f32[1,32], index: 4, kind: input, shape index: {}]
  %s5 = inlined_call_operand.hbm [shape: f32[2,32,256], index: 5, kind: output, shape index: {}]
  %s6 = sld [smem:[#allocation0]]
  $region57: #{tpu_custom_call.1} parent=0
    _
  %s8 = ssub.s32 1, %s6
  %s9 = scalar_select 0, %s8, %s6
  $region1: #{tpu_custom_call.1} parent=0
    #allocation2 [shape = 'u8[65536]{0}', space=vmem, size = 0x10000, scoped, tag = 'input window, operand 0']
    #allocation3 [shape = 's32[2]{0}', space=sflag, size = 0x8, scoped, tag = 'scoped memory for tpu_custom_call.1']
    #allocation4 [shape = 's32[2]{0}', space=sflag, size = 0x8, scoped, tag = 'scoped memory for tpu_custom_call.1']
    #allocation5 [shape = 'u8[65536]{0}', space=vmem, size = 0x10000, scoped, tag = 'output window, operand 0']
    %10 = vsyncpa [#allocation3], 0
    %s11 = scalar_lea.sflag [#allocation3], 1
    %12 = vsyncpa %s11, 0
    %13 = vsyncpa [#allocation4], 0
    %s14 = scalar_lea.sflag [#allocation4], 1
    %15 = vsyncpa %s14, 0
    loop: start=0, step=1, limit=4
    $region2: #{tpu_custom_call.1} parent=1 // loop_pre_header
      _
    $region3: #{tpu_custom_call.1} parent=1 // loop_header
      %s17 = sphi 0, %s21
      %p18 = scmp.ge.s32.totalorder %s17, 4
      %s27 = sphi 0, %s29
      %s30 = sphi 0, %s27
      %s31 = sphi 0, %s30
      %s47 = sphi 0, %s31
      %s51 = sphi 0, %s51
      %s53 = sphi 0, %s51
      %s54 = sphi 0, %s53
      %s68 = sphi 0, %s54
      %s72 = sphi 0, %s72
      %s74 = sphi 0, %s72
      %s75 = sphi 0, %s74
      %s89 = sphi 0, %s75
      %s93 = sphi 0, %s93
      %s95 = sphi 0, %s93
      %s96 = sphi 0, %s95
      %s110 = sphi 0, %s96
      %s114 = sphi 0, %s114
      %s116 = sphi 0, %s114
      %s117 = sphi 0, %s116
      %s131 = sphi 0, %s117
      %s137 = sphi 0, %s139
      %s140 = sphi 0, %s137
      %s141 = sphi 0, %s140
      %s157 = sphi 0, %s141
    $region4: #{tpu_custom_call.1} parent=1 // loop_header_branch
      %20 = sbr.rel (%p18) target = $region8
    $region5: #{tpu_custom_call.1} parent=1 // loop_body
      %s22 = ssub.s32 %s17, 1
      %s23 = ssub.s32 %s17, 2
      %s24 = sadd.s32 %s17, 1
      %s25 = ssub.s32 %s17, %s24
      %p26 = scmp.eq.s32.totalorder %s25, 0
      %s28 = sadd.s32 %s27, 1
      %s29 = scalar_select %p26, %s27, %s28
      %p32 = pneg %p26
      %p33 = scmp.eq.s32.totalorder %s17, 1
      %p34 = por %p32, %p33
      %p35 = scmp.ne.s32.totalorder %s27, %s30
      %p36 = scmp.eq.s32.totalorder %s17, 0
      %p37 = por %p35, %p36
      %p38 = scmp.ne.s32.totalorder %s27, %s30
      %p39 = scmp.eq.s32.totalorder %s22, 1
      %p40 = por %p38, %p39
      %p41 = scmp.ne.s32.totalorder %s30, %s31
      %p42 = scmp.eq.s32.totalorder %s22, 0
      %p43 = por %p41, %p42
      %p44 = scmp.ne.s32.totalorder %s30, %s31
      %p45 = scmp.eq.s32.totalorder %s23, 1
      %p46 = por %p44, %p45
      %p48 = scmp.ne.s32.totalorder %s31, %s47
      %p49 = scmp.eq.s32.totalorder %s23, 0
      %p50 = por %p48, %p49
      %s52 = sadd.s32 %s51, 1
      %p55 = scmp.eq.s32.totalorder %s17, 1
      %p56 = scmp.ne.s32.totalorder %s51, %s53
      %p57 = scmp.eq.s32.totalorder %s17, 0
      %p58 = por %p56, %p57
      %p59 = scmp.ne.s32.totalorder %s51, %s53
      %p60 = scmp.eq.s32.totalorder %s22, 1
      %p61 = por %p59, %p60
      %p62 = scmp.ne.s32.totalorder %s53, %s54
      %p63 = scmp.eq.s32.totalorder %s22, 0
      %p64 = por %p62, %p63
      %p65 = scmp.ne.s32.totalorder %s53, %s54
      %p66 = scmp.eq.s32.totalorder %s23, 1
      %p67 = por %p65, %p66
      %p69 = scmp.ne.s32.totalorder %s54, %s68
      %p70 = scmp.eq.s32.totalorder %s23, 0
      %p71 = por %p69, %p70
      %s73 = sadd.s32 %s72, 1
      %p76 = scmp.eq.s32.totalorder %s17, 1
      %p77 = scmp.ne.s32.totalorder %s72, %s74
      %p78 = scmp.eq.s32.totalorder %s17, 0
      %p79 = por %p77, %p78
      %p80 = scmp.ne.s32.totalorder %s72, %s74
      %p81 = scmp.eq.s32.totalorder %s22, 1
      %p82 = por %p80, %p81
      %p83 = scmp.ne.s32.totalorder %s74, %s75
      %p84 = scmp.eq.s32.totalorder %s22, 0
      %p85 = por %p83, %p84
      %p86 = scmp.ne.s32.totalorder %s74, %s75
      %p87 = scmp.eq.s32.totalorder %s23, 1
      %p88 = por %p86, %p87
      %p90 = scmp.ne.s32.totalorder %s75, %s89
      %p91 = scmp.eq.s32.totalorder %s23, 0
      %p92 = por %p90, %p91
      %s94 = sadd.s32 %s93, 1
      %p97 = scmp.eq.s32.totalorder %s17, 1
      %p98 = scmp.ne.s32.totalorder %s93, %s95
      %p99 = scmp.eq.s32.totalorder %s17, 0
      %p100 = por %p98, %p99
      %p101 = scmp.ne.s32.totalorder %s93, %s95
      %p102 = scmp.eq.s32.totalorder %s22, 1
      %p103 = por %p101, %p102
      %p104 = scmp.ne.s32.totalorder %s95, %s96
      %p105 = scmp.eq.s32.totalorder %s22, 0
      %p106 = por %p104, %p105
      %p107 = scmp.ne.s32.totalorder %s95, %s96
      %p108 = scmp.eq.s32.totalorder %s23, 1
      %p109 = por %p107, %p108
      %p111 = scmp.ne.s32.totalorder %s96, %s110
      %p112 = scmp.eq.s32.totalorder %s23, 0
      %p113 = por %p111, %p112
      %s115 = sadd.s32 %s114, 1
      %p118 = scmp.eq.s32.totalorder %s17, 1
      %p119 = scmp.ne.s32.totalorder %s114, %s116
      %p120 = scmp.eq.s32.totalorder %s17, 0
      %p121 = por %p119, %p120
      %p122 = scmp.ne.s32.totalorder %s114, %s116
      %p123 = scmp.eq.s32.totalorder %s22, 1
      %p124 = por %p122, %p123
      %p125 = scmp.ne.s32.totalorder %s116, %s117
      %p126 = scmp.eq.s32.totalorder %s22, 0
      %p127 = por %p125, %p126
      %p128 = scmp.ne.s32.totalorder %s116, %s117
      %p129 = scmp.eq.s32.totalorder %s23, 1
      %p130 = por %p128, %p129
      %p132 = scmp.ne.s32.totalorder %s117, %s131
      %p133 = scmp.eq.s32.totalorder %s23, 0
      %p134 = por %p132, %p133
      %s135 = ssub.s32 %s17, %s24
      %p136 = scmp.eq.s32.totalorder %s135, 0
      %s138 = sadd.s32 %s137, 1
      %s139 = scalar_select %p136, %s137, %s138
      %p142 = pneg %p136
      %p143 = scmp.eq.s32.totalorder %s17, 1
      %p144 = por %p142, %p143
      %p145 = scmp.ne.s32.totalorder %s137, %s140
      %p146 = scmp.eq.s32.totalorder %s17, 0
      %p147 = por %p145, %p146
      %p148 = scmp.ne.s32.totalorder %s137, %s140
      %p149 = scmp.eq.s32.totalorder %s22, 1
      %p150 = por %p148, %p149
      %p151 = scmp.ne.s32.totalorder %s140, %s141
      %p152 = scmp.eq.s32.totalorder %s22, 0
      %p153 = por %p151, %p152
      %p154 = scmp.ne.s32.totalorder %s140, %s141
      %p155 = scmp.eq.s32.totalorder %s23, 1
      %p156 = por %p154, %p155
      %p158 = scmp.ne.s32.totalorder %s141, %s157
      %p159 = scmp.eq.s32.totalorder %s23, 0
      %p160 = por %p158, %p159
      %p161 = scmp.le.s32.totalorder 1, %s17
      %p162 = scmp.lt.s32.totalorder %s17, 3
      %p163 = pnand %p161, %p162
      %p164 = pneg %p163
      // Predicated region
      $region9: #{tpu_custom_call.1} parent=5 // pred_check
        _
      $region10: #{tpu_custom_call.1} parent=5 // pred_check_branch
        %166 = sbr.rel (%p163) target = $region12
      $region11: #{tpu_custom_call.1} parent=5 // pred_region
        %s167 = ssub.s32 %s17, 1
        // Predicated region
        $region13: #{tpu_custom_call.1} parent=11 // pred_check
          %p168 = pneg %p64
        $region14: #{tpu_custom_call.1} parent=11 // pred_check_branch
          %170 = sbr.rel (%p168) target = $region16
        $region15: #{tpu_custom_call.1} parent=11 // pred_region
          _
        $region16: #{tpu_custom_call.1} parent=11 // pred_fallthru
          _
        // Predicated region
        $region17: #{tpu_custom_call.1} parent=11 // pred_check
          %p171 = pneg %p85
        $region18: #{tpu_custom_call.1} parent=11 // pred_check_branch
          %173 = sbr.rel (%p171) target = $region20
        $region19: #{tpu_custom_call.1} parent=11 // pred_region
          _
        $region20: #{tpu_custom_call.1} parent=11 // pred_fallthru
          _
        // Predicated region
        $region21: #{tpu_custom_call.1} parent=11 // pred_check
          %p174 = pneg %p106
        $region22: #{tpu_custom_call.1} parent=11 // pred_check_branch
          %176 = sbr.rel (%p174) target = $region24
        $region23: #{tpu_custom_call.1} parent=11 // pred_region
          _
        $region24: #{tpu_custom_call.1} parent=11 // pred_fallthru
          _
        // Predicated region
        $region25: #{tpu_custom_call.1} parent=11 // pred_check
          %p177 = pneg %p127
        $region26: #{tpu_custom_call.1} parent=11 // pred_check_branch
          %179 = sbr.rel (%p177) target = $region28
        $region27: #{tpu_custom_call.1} parent=11 // pred_region
          _
        $region28: #{tpu_custom_call.1} parent=11 // pred_fallthru
          _
      $region12: #{tpu_custom_call.1} parent=5 // pred_fallthru
        _
      %p180 = scmp.lt.s32.totalorder %s17, 2
      // Predicated region
      $region29: #{tpu_custom_call.1} parent=5 // pred_check
        %p181 = pneg %p180
      $region30: #{tpu_custom_call.1} parent=5 // pred_check_branch
        %183 = sbr.rel (%p181) target = $region32
      $region31: #{tpu_custom_call.1} parent=5 // pred_region
        // Predicated region
        $region33: #{tpu_custom_call.1} parent=31 // pred_check
          %p184 = pneg %p37
        $region34: #{tpu_custom_call.1} parent=31 // pred_check_branch
          %186 = sbr.rel (%p184) target = $region36
        $region35: #{tpu_custom_call.1} parent=31 // pred_region
          %s187 = sand.u32 %s27, 1
          %s188 = scalar_lea.sflag [#allocation3], %s187
          %s189 = sand.u32 %s27, 1
          %s190 = smul.addr %s189, 64
          %s191 = scalar_lea.vmem [#allocation2], %s190
          %s193 = ssub.s32 1024, 1024
          %194 = vsyncadd %s188, %s193
          %s195 = smul.addr %s17, 8
          %s196 = smul.addr %s195, 128
          %s197 = scalar_lea.hbm %s0, %s196
          %s198 = sshll.u32 %s191, 4
          %s199 = int_to_ptr.vmem [resolvable:$true] %s198
          %204 = dma.hbm_to_vmem [thread:$0]  %s197, 1024, %s199, %s188, 256, 256, 16
        $region36: #{tpu_custom_call.1} parent=31 // pred_fallthru
          _
      $region32: #{tpu_custom_call.1} parent=5 // pred_fallthru
        _
      %p205 = scmp.le.s32.totalorder 1, %s17
      %p206 = scmp.lt.s32.totalorder %s17, 3
      %p207 = pnand %p205, %p206
      %p208 = pneg %p207
      // Predicated region
      $region37: #{tpu_custom_call.1} parent=5 // pred_check
        _
      $region38: #{tpu_custom_call.1} parent=5 // pred_check_branch
        %210 = sbr.rel (%p207) target = $region40
      $region39: #{tpu_custom_call.1} parent=5 // pred_region
        %s211 = ssub.s32 %s17, 1
        %s212 = sand.u32 %s30, 1
        %s213 = scalar_lea.sflag [#allocation3], %s212
        %s214 = sand.u32 %s30, 1
        %s215 = smul.addr %s214, 64
        %s216 = scalar_lea.vmem [#allocation2], %s215
        // Predicated region
        $region41: #{tpu_custom_call.1} parent=39 // pred_check
          %p217 = pneg %p43
        $region42: #{tpu_custom_call.1} parent=39 // pred_check_branch
          %219 = sbr.rel (%p217) target = $region44
        $region43: #{tpu_custom_call.1} parent=39 // pred_region
          %220 = dma.done %s213, 1024
        $region44: #{tpu_custom_call.1} parent=39 // pred_fallthru
          _
        %s221 = sand.u32 %s30, 1
        %s222 = scalar_lea.sflag [#allocation3], %s221
        %s223 = sand.u32 %s30, 1
        %s224 = smul.addr %s223, 64
        %s225 = scalar_lea.vmem [#allocation2], %s224
        %p226 = pneg %p43
        %p227 = pneg %p40
        %p228 = pneg %p64
        %p229 = pneg %p61
        %p230 = pneg %p85
        %p231 = pneg %p82
        %p232 = pneg %p106
        %p233 = pneg %p103
        %p234 = pneg %p127
        %p235 = pneg %p124
        %p236 = pneg %p153
        %p237 = pneg %p150
        %s238 = sand.u32 %s140, 1
        %s239 = scalar_lea.sflag [#allocation4], %s238
        %s240 = sand.u32 %s140, 1
        %s241 = smul.addr %s240, 64
        %s242 = scalar_lea.vmem [#allocation5], %s241
        %v243 = vld [vmem:[%s216] sm:$0xff]
        %v244 = vld [vmem:[%s216 + $0x8] sm:$0xff]
        %v245 = vld [vmem:[%s216 + $0x10] sm:$0xff]
        %v246 = vld [vmem:[%s216 + $0x18] sm:$0xff]
        %v247 = vld [vmem:[%s216 + $0x20] sm:$0xff]
        %v248 = vld [vmem:[%s216 + $0x28] sm:$0xff]
        %v249 = vld [vmem:[%s216 + $0x30] sm:$0xff]
        %v250 = vld [vmem:[%s216 + $0x38] sm:$0xff]
        %v251 = vadd.f32 %v243, %v244
        %252 = vadd.xlane.f32.xlu0 %v251
        %v253 = vpop.xlane.xlu0 %252
        %v254 = vadd.f32 %v245, %v246
        %255 = vadd.xlane.f32.xlu0 %v254
        %v256 = vpop.xlane.xlu0 %255
        %v257 = vadd.f32 %v247, %v248
        %258 = vadd.xlane.f32.xlu0 %v257
        %v259 = vpop.xlane.xlu0 %258
        %v260 = vadd.f32 %v249, %v250
        %261 = vadd.xlane.f32.xlu0 %v260
        %v262 = vpop.xlane.xlu0 %261
        %v263 = vmul.f32 %v253, 0.00390625
        %v264 = vmul.f32 %v256, 0.00390625
        %v265 = vmul.f32 %v259, 0.00390625
        %v266 = vmul.f32 %v262, 0.00390625
        %v267 = vld [vmem:[%s1] sm:$0xff]
        %v268 = vld [vmem:[%s1 + $0x8] sm:$0xff]
        %v269 = vld [vmem:[%s1 + $0x10] sm:$0xff]
        %v270 = vld [vmem:[%s1 + $0x18] sm:$0xff]
        %v271 = vmul.f32 %v263, %v267
        %v272 = vmul.f32 %v264, %v268
        %v273 = vmul.f32 %v265, %v269
        %v274 = vmul.f32 %v266, %v270
        %vm275 = vcmask 15360
        %v276 = vsel %vm275, %v271, 0.0
        %v277 = vsel %vm275, %v272, 0.0
        %v278 = vadd.f32 %v276, %v277
        %v279 = vsel %vm275, %v273, 0.0
        %v280 = vadd.f32 %v278, %v279
        %v281 = vsel %vm275, %v274, 0.0
        %v282 = vadd.f32 %v280, %v281
        %v283 = vrot.slane %v282, 4
        %v284 = vadd.f32 %v282, %v283
        %v285 = vrot.slane %v284, 2
        %v286 = vadd.f32 %v284, %v285
        %v287 = vrot.slane %v286, 1
        %v288 = vadd.f32 %v286, %v287
        %v289 = vld [vmem:[%s2] sm:$0x1]
        %v290 = vadd.f32 %v288, %v289
        %v291 = vmax.f32 %v290, 0.0
        %v292 = vlaneseq
        %v293 = vshrl.u32 %v292, 7
        %v294 = vsub.s32 0, %v293
        %v295 = vrot.slane %v291, %v294
        %297 = vbcast.lane.b32.xlu0 %v295, 256
        %v298 = vpop.permute.xlu0 %297
        %v299 = vld [vmem:[%s3] sm:$0x3]
        %v300 = vmul.f32 %v298, %v299
        %vm301 = vcmask 254976
        %v302 = vsel %vm301, %v300, 0.0
        %v303 = vrot.slane %v302, 4
        %v304 = vadd.f32 %v302, %v303
        %v305 = vrot.slane %v304, 2
        %v306 = vadd.f32 %v304, %v305
        %v307 = vrot.slane %v306, 1
        %v308 = vadd.f32 %v306, %v307
        %v309 = vld [vmem:[%s4] sm:$0x1]
        %v310 = vadd.f32 %v308, %v309
        %v311 = vsub.f32 0.0, %v310
        %v312 = vmul.f32 %v311, 1.442695
        %v313 = vpow.pop %v312
        %v314 = vadd.f32 %v313, 1.0
        %v315 = vrcp.pop %v314
        %v316 = vmul.f32 1.0, %v315
        %v317 = vlaneseq
        %v318 = vshrl.u32 %v317, 7
        %v319 = vsub.s32 0, %v318
        %v320 = vrot.slane %v316, %v319
        %322 = vbcast.lane.b32.xlu0 %v320, 256
        %v323 = vpop.permute.xlu0 %322
        %s325 = sor.u32 256, 8
        %326 = vbcast.lane.b32.xlu0 %v320, %s325
        %v327 = vpop.permute.xlu0 %326
        %s329 = sor.u32 256, 16
        %330 = vbcast.lane.b32.xlu0 %v320, %s329
        %v331 = vpop.permute.xlu0 %330
        %s333 = sor.u32 256, 24
        %334 = vbcast.lane.b32.xlu0 %v320, %s333
        %v335 = vpop.permute.xlu0 %334
        %v336 = vmul.f32 %v243, %v323
        %v337 = vmul.f32 %v244, %v323
        %v338 = vmul.f32 %v245, %v327
        %v339 = vmul.f32 %v246, %v327
        %v340 = vmul.f32 %v247, %v331
        %v341 = vmul.f32 %v248, %v331
        %v342 = vmul.f32 %v249, %v335
        %v343 = vmul.f32 %v250, %v335
        %344 = vst [vmem:[%s242] sm:$0xff] %v336
        %345 = vst [vmem:[%s242 + $0x8] sm:$0xff] %v337
        %346 = vst [vmem:[%s242 + $0x10] sm:$0xff] %v338
        %347 = vst [vmem:[%s242 + $0x18] sm:$0xff] %v339
        %348 = vst [vmem:[%s242 + $0x20] sm:$0xff] %v340
        %349 = vst [vmem:[%s242 + $0x28] sm:$0xff] %v341
        %350 = vst [vmem:[%s242 + $0x30] sm:$0xff] %v342
        %351 = vst [vmem:[%s242 + $0x38] sm:$0xff] %v343
        %s352 = sand.u32 %s140, 1
        %s353 = scalar_lea.sflag [#allocation4], %s352
        %s354 = sand.u32 %s140, 1
        %s355 = smul.addr %s354, 64
        %s356 = scalar_lea.vmem [#allocation5], %s355
        // Predicated region
        $region45: #{tpu_custom_call.1} parent=39 // pred_check
          %p357 = pneg %p150
        $region46: #{tpu_custom_call.1} parent=39 // pred_check_branch
          %359 = sbr.rel (%p357) target = $region48
        $region47: #{tpu_custom_call.1} parent=39 // pred_region
          %s361 = ssub.s32 1024, 1024
          %362 = vsyncadd %s353, %s361
          %s363 = smul.addr %s22, 8
          %s364 = smul.addr %s363, 128
          %s365 = scalar_lea.hbm %s5, %s364
          %s366 = sshll.u32 %s356, 4
          %s367 = int_to_ptr.vmem [resolvable:$true] %s366
          %372 = dma.vmem_to_hbm [thread:$0]  %s367, 1024, %s365, %s353, 256, 256, 16
        $region48: #{tpu_custom_call.1} parent=39 // pred_fallthru
          _
      $region40: #{tpu_custom_call.1} parent=5 // pred_fallthru
        _
      %p373 = scmp.le.s32.totalorder 2, %s17
      // Predicated region
      $region49: #{tpu_custom_call.1} parent=5 // pred_check
        %p374 = pneg %p373
      $region50: #{tpu_custom_call.1} parent=5 // pred_check_branch
        %376 = sbr.rel (%p374) target = $region52
      $region51: #{tpu_custom_call.1} parent=5 // pred_region
        %s377 = ssub.s32 %s17, 2
        // Predicated region
        $region53: #{tpu_custom_call.1} parent=51 // pred_check
          %p378 = pneg %p156
        $region54: #{tpu_custom_call.1} parent=51 // pred_check_branch
          %380 = sbr.rel (%p378) target = $region56
        $region55: #{tpu_custom_call.1} parent=51 // pred_region
          %s381 = sand.u32 %s141, 1
          %s382 = scalar_lea.sflag [#allocation4], %s381
          %s383 = sand.u32 %s141, 1
          %s384 = smul.addr %s383, 64
          %s385 = scalar_lea.vmem [#allocation5], %s384
          %386 = dma.done %s382, 1024
        $region56: #{tpu_custom_call.1} parent=51 // pred_fallthru
          _
      $region52: #{tpu_custom_call.1} parent=5 // pred_fallthru
        _
    $region6: #{tpu_custom_call.1} parent=1 // loop_footer
      %s21 = sadd.s32 1, %s17
    $region7: #{tpu_custom_call.1} parent=1 // loop_footer_branch
      %16 = sbr.rel target = $region3
    $region8: #{tpu_custom_call.1} parent=1 // loop_exit
      _
    %387 = vsyncpa [#allocation3], 1
    %s388 = scalar_lea.sflag [#allocation3], 1
    %389 = vsyncpa %s388, 1
    %390 = vsyncpa [#allocation4], 1
    %s391 = scalar_lea.sflag [#allocation4], 1
    %392 = vsyncpa %s391, 1

</llo_original>
